<compile_context>
chip_gen: v5e
topology: v5e:2x2
jax: 0.10.0
libtpu: 0.0.40
codegen_flags: <defaults>
</compile_context>

<pallas_src>
import jax
import jax.numpy as jnp
from jax import lax
from jax.experimental import pallas as pl
from jax.experimental.pallas import tpu as pltpu


def pblstm_kernel(xf_ref, xb_ref, wih_ref, whh_ref, b_ref,
                  out_f_ref, out_b_ref, hn_ref, cn_ref,
                  hf_ref, cf_ref, hb_ref, cb_ref, gxf_ref, gxb_ref):
    t = pl.program_id(0)
    nb = pl.num_programs(0)
    Tc, B, D = xf_ref.shape
    H = whh_ref.shape[1]

    # Reset the h/c carries at the first time chunk.
    @pl.when(t == 0)
    def _():
        hf_ref[...] = jnp.zeros_like(hf_ref)
        cf_ref[...] = jnp.zeros_like(cf_ref)
        hb_ref[...] = jnp.zeros_like(hb_ref)
        cb_ref[...] = jnp.zeros_like(cb_ref)

    # Hoisted input projection + fused bias: one big MXU matmul per direction.
    def project(x_block, wih, bias):
        x2 = x_block.reshape(Tc * B, D)                                    # bf16
        gx = jnp.dot(x2, wih, preferred_element_type=jnp.float32) + bias   # f32
        return gx.reshape(Tc, B, 4 * H)

    gxf_ref[...] = project(xf_ref[...], wih_ref[0], b_ref[0])
    gxb_ref[...] = project(xb_ref[...], wih_ref[1], b_ref[1])

    whh_f = whh_ref[0]   # [H, 4H] bf16, resident across all chunks
    whh_b = whh_ref[1]

    def cell(gx, h, c, whh):
        # Recurrent dot in bf16 on the MXU; gate/state math in f32.
        gates = gx + jnp.dot(h.astype(whh.dtype), whh,
                             preferred_element_type=jnp.float32)
        i = jax.nn.sigmoid(gates[:, 0:H])
        f = jax.nn.sigmoid(gates[:, H:2 * H])
        g = jnp.tanh(gates[:, 2 * H:3 * H])
        o = jax.nn.sigmoid(gates[:, 3 * H:4 * H])
        c_new = f * c + i * g
        h_new = o * jnp.tanh(c_new)
        return h_new, c_new

    def step(s, carry):
        h_f, c_f, h_b, c_b = carry
        sb = Tc - 1 - s                     # backward local time index
        # Two independent recurrence chains interleaved -> ILP per iteration.
        h_f, c_f = cell(gxf_ref[s], h_f, c_f, whh_f)
        h_b, c_b = cell(gxb_ref[sb], h_b, c_b, whh_b)
        out_f_ref[s] = h_f
        out_b_ref[sb] = h_b
        return h_f, c_f, h_b, c_b

    h_f, c_f, h_b, c_b = lax.fori_loop(
        0, Tc, step, (hf_ref[...], cf_ref[...], hb_ref[...], cb_ref[...]))

    hf_ref[...] = h_f
    cf_ref[...] = c_f
    hb_ref[...] = h_b
    cb_ref[...] = c_b

    # Final states (PyTorch h_n / c_n layout: [2, B, H], fwd then bwd).
    @pl.when(t == nb - 1)
    def _():
        hn_ref[0] = h_f
        hn_ref[1] = h_b
        cn_ref[0] = c_f
        cn_ref[1] = c_b


def _pick_time_chunk(T, target):
    c = max(1, min(target, T))
    while T % c != 0:
        c -= 1
    return c


def init_params(key, in_dim, out_dim):
    """Deterministic init matching PyTorch LSTM shapes (weights pre-transposed,
    gate order i,f,g,o; bias = b_ih + b_hh; leading dim = direction fwd/bwd)."""
    H = out_dim
    bound = 1.0 / (H ** 0.5)
    ks = jax.random.split(key, 8)

    def u(k, shape):
        return jax.random.uniform(k, shape, jnp.float32, -bound, bound)

    wih = jnp.stack([u(ks[0], (in_dim, 4 * H)), u(ks[4], (in_dim, 4 * H))])
    whh = jnp.stack([u(ks[1], (H, 4 * H)), u(ks[5], (H, 4 * H))])
    b = jnp.stack([u(ks[2], (1, 4 * H)) + u(ks[3], (1, 4 * H)),
                   u(ks[6], (1, 4 * H)) + u(ks[7], (1, 4 * H))])
    return dict(wih=wih, whh=whh, b=b)


def pblstm_forward(x, params, *, time_chunk=128, mxu_dtype=jnp.bfloat16):
    """x: [B, T, in_dim] -> (downsampled [B, T//2, 4H], (h_n [2,B,H], c_n [2,B,H]))."""
    B, T, D = x.shape
    H = params["whh"].shape[1]
    Tc = _pick_time_chunk(T, time_chunk)
    nb = T // Tc

    # Time-major, bf16 operands for the MXU.
    # NOTE: size Tc to the target chip's VMEM (v7x: 64 MiB/TC); the dominant
    # scratch is 2 * Tc*B*4H f32 plus the double-buffered x/out blocks.
    x_tm = jnp.transpose(x, (1, 0, 2)).astype(mxu_dtype)     # [T, B, D]
    wih = params["wih"].astype(mxu_dtype)                    # [2, D, 4H]
    whh = params["whh"].astype(mxu_dtype)                    # [2, H, 4H]
    b = params["b"].astype(jnp.float32)                      # [2, 1, 4H]

    out_f, out_b, h_n, c_n = pl.pallas_call(
        pblstm_kernel,
        out_shape=(
            jax.ShapeDtypeStruct((T, B, H), jnp.float32),    # fwd hidden seq
            jax.ShapeDtypeStruct((T, B, H), jnp.float32),    # bwd hidden seq
            jax.ShapeDtypeStruct((2, B, H), jnp.float32),    # h_n
            jax.ShapeDtypeStruct((2, B, H), jnp.float32),    # c_n
        ),
        grid=(nb,),
        in_specs=[
            pl.BlockSpec((Tc, B, D), lambda t: (t, 0, 0)),            # x, fwd order
            pl.BlockSpec((Tc, B, D), lambda t: (nb - 1 - t, 0, 0)),   # x, bwd order
            pl.BlockSpec((2, D, 4 * H), lambda t: (0, 0, 0)),         # W_ih (both dirs)
            pl.BlockSpec((2, H, 4 * H), lambda t: (0, 0, 0)),         # W_hh (both dirs)
            pl.BlockSpec((2, 1, 4 * H), lambda t: (0, 0, 0)),         # fused bias
        ],
        out_specs=(
            pl.BlockSpec((Tc, B, H), lambda t: (t, 0, 0)),
            pl.BlockSpec((Tc, B, H), lambda t: (nb - 1 - t, 0, 0)),
            pl.BlockSpec((2, B, H), lambda t: (0, 0, 0)),
            pl.BlockSpec((2, B, H), lambda t: (0, 0, 0)),
        ),
        scratch_shapes=[
            pltpu.VMEM((B, H), jnp.float32),           # h carry, fwd
            pltpu.VMEM((B, H), jnp.float32),           # c carry, fwd
            pltpu.VMEM((B, H), jnp.float32),           # h carry, bwd
            pltpu.VMEM((B, H), jnp.float32),           # c carry, bwd
            pltpu.VMEM((Tc, B, 4 * H), jnp.float32),   # hoisted gates, fwd chunk
            pltpu.VMEM((Tc, B, 4 * H), jnp.float32),   # hoisted gates, bwd chunk
        ],
        compiler_params=pltpu.CompilerParams(
            dimension_semantics=("arbitrary",)),       # time chunks are sequential
    )(x_tm, x_tm, wih, whh, b)

    # Single fused epilogue pass: [T,B,H] x2 -> [B,T,2H], then the .view-style
    # time downsample (drop last frame if T is odd), as in the PyTorch module.
    lstm_out = jnp.concatenate(
        [jnp.transpose(out_f, (1, 0, 2)), jnp.transpose(out_b, (1, 0, 2))],
        axis=-1)
    t_dim = lstm_out.shape[1]
    if t_dim % 2 != 0:
        lstm_out = lstm_out[:, :t_dim - 1, :]
        t_dim -= 1
    out = lstm_out.reshape((-1, t_dim // 2, lstm_out.shape[2] * 2))
    return out, (h_n, c_n)


def pblstm_reference(x, params, mxu_dtype=jnp.bfloat16):
    """Pure-JAX reference with the same precision recipe (bf16 MXU operands,
    f32 accumulation and gate/state math) for tight correctness checking."""
    B, T, D = x.shape
    H = params["whh"].shape[1]
    x_tm = jnp.transpose(x, (1, 0, 2)).astype(mxu_dtype)

    def run_dir(d, reverse):
        wih = params["wih"][d].astype(mxu_dtype)
        whh = params["whh"][d].astype(mxu_dtype)
        bias = params["b"][d]
        gx = (jnp.dot(x_tm.reshape(T * B, D), wih,
                      preferred_element_type=jnp.float32)
              ).reshape(T, B, 4 * H) + bias

        def cell(carry, gx_t):
            h, c = carry
            gates = gx_t + jnp.dot(h.astype(mxu_dtype), whh,
                                   preferred_element_type=jnp.float32)
            i = jax.nn.sigmoid(gates[:, :H])
            f = jax.nn.sigmoid(gates[:, H:2 * H])
            g = jnp.tanh(gates[:, 2 * H:3 * H])
            o = jax.nn.sigmoid(gates[:, 3 * H:])
            c_new = f * c + i * g
            h_new = o * jnp.tanh(c_new)
            return (h_new, c_new), h_new

        init = (jnp.zeros((B, H), jnp.float32), jnp.zeros((B, H), jnp.float32))
        (hT, cT), hs = lax.scan(cell, init, gx, reverse=reverse)
        return hs, hT, cT

    hs_f, hT_f, cT_f = run_dir(0, False)
    hs_b, hT_b, cT_b = run_dir(1, True)
    lstm_out = jnp.concatenate([jnp.transpose(hs_f, (1, 0, 2)),
                                jnp.transpose(hs_b, (1, 0, 2))], axis=-1)
    t_dim = lstm_out.shape[1]
    if t_dim % 2 != 0:
        lstm_out = lstm_out[:, :t_dim - 1, :]
        t_dim -= 1
    out = lstm_out.reshape((-1, t_dim // 2, lstm_out.shape[2] * 2))
    h_n = jnp.stack([hT_f, hT_b], axis=0)
    c_n = jnp.stack([cT_f, cT_b], axis=0)
    return out, (h_n, c_n)


if __name__ == "__main__":
    B, T, in_dim, out_dim = 2, 8, 16, 32
    key = jax.random.PRNGKey(0)
    kx, kp = jax.random.split(key)
    x = jax.random.normal(kx, (B, T, in_dim), jnp.float32)
    params = init_params(kp, in_dim, out_dim)

    # time_chunk=4 -> 2 time chunks, exercising the carried h/c scratch.
    out, (h_n, c_n) = pblstm_forward(x, params, time_chunk=4)
    jax.block_until_ready((out, h_n, c_n))

    ref_out, (ref_h, ref_c) = pblstm_reference(x, params)
    assert out.shape == (B, T // 2, 4 * out_dim), out.shape
    assert jnp.allclose(out, ref_out, atol=2e-3, rtol=2e-3), \
        float(jnp.max(jnp.abs(out - ref_out)))
    assert jnp.allclose(h_n, ref_h, atol=2e-3, rtol=2e-3)
    assert jnp.allclose(c_n, ref_c, atol=2e-3, rtol=2e-3)

    print("KERNEL_OK")
</pallas_src>

<mosaic_0001>
module attributes {stable_mosaic.version = 11 : i64} {
  func.func @pblstm_kernel(%arg0: i32, %arg1: memref<4x2x16xbf16, #tpu.memory_space<vmem>>, %arg2: memref<4x2x16xbf16, #tpu.memory_space<vmem>>, %arg3: memref<2x16x128xbf16, #tpu.memory_space<vmem>>, %arg4: memref<2x32x128xbf16, #tpu.memory_space<vmem>>, %arg5: memref<2x1x128xf32, #tpu.memory_space<vmem>>, %arg6: memref<4x2x32xf32, #tpu.memory_space<vmem>>, %arg7: memref<4x2x32xf32, #tpu.memory_space<vmem>>, %arg8: memref<2x2x32xf32, #tpu.memory_space<vmem>>, %arg9: memref<2x2x32xf32, #tpu.memory_space<vmem>>, %arg10: memref<2x32xf32, #tpu.memory_space<vmem>>, %arg11: memref<2x32xf32, #tpu.memory_space<vmem>>, %arg12: memref<2x32xf32, #tpu.memory_space<vmem>>, %arg13: memref<2x32xf32, #tpu.memory_space<vmem>>, %arg14: memref<4x2x128xf32, #tpu.memory_space<vmem>>, %arg15: memref<4x2x128xf32, #tpu.memory_space<vmem>>) attributes {dimension_semantics = [#tpu.dimension_semantics<arbitrary>], iteration_bounds = array<i64: 2>, scalar_prefetch = 0 : i64, scratch_operands = 6 : i64, tpu.core_type = #tpu.core_type<tc>, window_params = [{transform_indices = @transform_0, window_bounds = array<i64: 4, 2, 16>}, {transform_indices = @transform_1, window_bounds = array<i64: 4, 2, 16>}, {pipeline_mode = #tpu.pipeline_mode<synchronous>, transform_indices = @transform_2, window_bounds = array<i64: 2, 16, 128>}, {pipeline_mode = #tpu.pipeline_mode<synchronous>, transform_indices = @transform_3, window_bounds = array<i64: 2, 32, 128>}, {pipeline_mode = #tpu.pipeline_mode<synchronous>, transform_indices = @transform_4, window_bounds = array<i64: 2, 1, 128>}, {transform_indices = @transform_5, window_bounds = array<i64: 4, 2, 32>}, {transform_indices = @transform_6, window_bounds = array<i64: 4, 2, 32>}, {pipeline_mode = #tpu.pipeline_mode<synchronous>, transform_indices = @transform_7, window_bounds = array<i64: 2, 2, 32>}, {pipeline_mode = #tpu.pipeline_mode<synchronous>, transform_indices = @transform_8, window_bounds = array<i64: 2, 2, 32>}]} {
    %c0_i32 = arith.constant 0 : i32
    %0 = arith.cmpi eq, %arg0, %c0_i32 : i32
    %1 = arith.extui %0 : i1 to i32
    %c0_i32_0 = arith.constant 0 : i32
    %2 = arith.cmpi ne, %1, %c0_i32_0 : i32
    scf.if %2 {
      %cst_50 = arith.constant 0.000000e+00 : f32
      %42 = vector.broadcast %cst_50 : f32 to vector<2x32xf32>
      %c0_51 = arith.constant 0 : index
      %c0_52 = arith.constant 0 : index
      %43 = vector.load %arg10[%c0_51, %c0_52] : memref<2x32xf32, #tpu.memory_space<vmem>>, vector<2x32xf32>
      tpu.vector_store %arg10[%c0_51, %c0_52], %42 {strides = array<i32>} : memref<2x32xf32, #tpu.memory_space<vmem>>, vector<2x32xf32>,
      %cst_53 = arith.constant 0.000000e+00 : f32
      %44 = vector.broadcast %cst_53 : f32 to vector<2x32xf32>
      %c0_54 = arith.constant 0 : index
      %c0_55 = arith.constant 0 : index
      %45 = vector.load %arg11[%c0_54, %c0_55] : memref<2x32xf32, #tpu.memory_space<vmem>>, vector<2x32xf32>
      tpu.vector_store %arg11[%c0_54, %c0_55], %44 {strides = array<i32>} : memref<2x32xf32, #tpu.memory_space<vmem>>, vector<2x32xf32>,
      %cst_56 = arith.constant 0.000000e+00 : f32
      %46 = vector.broadcast %cst_56 : f32 to vector<2x32xf32>
      %c0_57 = arith.constant 0 : index
      %c0_58 = arith.constant 0 : index
      %47 = vector.load %arg12[%c0_57, %c0_58] : memref<2x32xf32, #tpu.memory_space<vmem>>, vector<2x32xf32>
      tpu.vector_store %arg12[%c0_57, %c0_58], %46 {strides = array<i32>} : memref<2x32xf32, #tpu.memory_space<vmem>>, vector<2x32xf32>,
      %cst_59 = arith.constant 0.000000e+00 : f32
      %48 = vector.broadcast %cst_59 : f32 to vector<2x32xf32>
      %c0_60 = arith.constant 0 : index
      %c0_61 = arith.constant 0 : index
      %49 = vector.load %arg13[%c0_60, %c0_61] : memref<2x32xf32, #tpu.memory_space<vmem>>, vector<2x32xf32>
      tpu.vector_store %arg13[%c0_60, %c0_61], %48 {strides = array<i32>} : memref<2x32xf32, #tpu.memory_space<vmem>>, vector<2x32xf32>,
    } else {
    }
    %c0 = arith.constant 0 : index
    %c0_1 = arith.constant 0 : index
    %c0_2 = arith.constant 0 : index
    %3 = vector.load %arg1[%c0, %c0_1, %c0_2] : memref<4x2x16xbf16, #tpu.memory_space<vmem>>, vector<4x2x16xbf16>
    %c0_3 = arith.constant 0 : index
    %c0_4 = arith.constant 0 : index
    %c0_5 = arith.constant 0 : index
    %4 = vector.load %arg3[%c0_3, %c0_4, %c0_5] : memref<2x16x128xbf16, #tpu.memory_space<vmem>>, vector<1x16x128xbf16>
    %5 = vector.shape_cast %4 : vector<1x16x128xbf16> to vector<16x128xbf16>
    %c0_6 = arith.constant 0 : index
    %c0_7 = arith.constant 0 : index
    %c0_8 = arith.constant 0 : index
    %6 = vector.load %arg5[%c0_6, %c0_7, %c0_8] : memref<2x1x128xf32, #tpu.memory_space<vmem>>, vector<1x1x128xf32>
    %7 = vector.shape_cast %6 : vector<1x1x128xf32> to vector<1x128xf32>
    %8 = vector.shape_cast %3 : vector<4x2x16xbf16> to vector<8x16xbf16>
    %cst = arith.constant dense<0.000000e+00> : vector<8x128xf32>
    %9 = tpu.matmul %8, %5, %cst {dimension_numbers = #tpu.dot_dimension_numbers<[1], [0], [0], [1], [0, 0, 1, 1], [], []>} : vector<8x16xbf16>, vector<16x128xbf16>, vector<8x128xf32> -> vector<8x128xf32>
    %10 = vector.broadcast %7 : vector<1x128xf32> to vector<8x128xf32>
    %11 = arith.addf %9, %10 : vector<8x128xf32>
    %12 = vector.shape_cast %11 : vector<8x128xf32> to vector<4x2x128xf32>
    %c0_9 = arith.constant 0 : index
    %c0_10 = arith.constant 0 : index
    %c0_11 = arith.constant 0 : index
    %13 = vector.load %arg14[%c0_9, %c0_10, %c0_11] : memref<4x2x128xf32, #tpu.memory_space<vmem>>, vector<4x2x128xf32>
    tpu.vector_store %arg14[%c0_9, %c0_10, %c0_11], %12 {strides = array<i32>} : memref<4x2x128xf32, #tpu.memory_space<vmem>>, vector<4x2x128xf32>,
    %c0_12 = arith.constant 0 : index
    %c0_13 = arith.constant 0 : index
    %c0_14 = arith.constant 0 : index
    %14 = vector.load %arg2[%c0_12, %c0_13, %c0_14] : memref<4x2x16xbf16, #tpu.memory_space<vmem>>, vector<4x2x16xbf16>
    %c1 = arith.constant 1 : index
    %c0_15 = arith.constant 0 : index
    %c0_16 = arith.constant 0 : index
    %15 = vector.load %arg3[%c1, %c0_15, %c0_16] : memref<2x16x128xbf16, #tpu.memory_space<vmem>>, vector<1x16x128xbf16>
    %16 = vector.shape_cast %15 : vector<1x16x128xbf16> to vector<16x128xbf16>
    %c1_17 = arith.constant 1 : index
    %c0_18 = arith.constant 0 : index
    %c0_19 = arith.constant 0 : index
    %17 = vector.load %arg5[%c1_17, %c0_18, %c0_19] : memref<2x1x128xf32, #tpu.memory_space<vmem>>, vector<1x1x128xf32>
    %18 = vector.shape_cast %17 : vector<1x1x128xf32> to vector<1x128xf32>
    %19 = vector.shape_cast %14 : vector<4x2x16xbf16> to vector<8x16xbf16>
    %cst_20 = arith.constant dense<0.000000e+00> : vector<8x128xf32>
    %20 = tpu.matmul %19, %16, %cst_20 {dimension_numbers = #tpu.dot_dimension_numbers<[1], [0], [0], [1], [0, 0, 1, 1], [], []>} : vector<8x16xbf16>, vector<16x128xbf16>, vector<8x128xf32> -> vector<8x128xf32>
    %21 = vector.broadcast %18 : vector<1x128xf32> to vector<8x128xf32>
    %22 = arith.addf %20, %21 : vector<8x128xf32>
    %23 = vector.shape_cast %22 : vector<8x128xf32> to vector<4x2x128xf32>
    %c0_21 = arith.constant 0 : index
    %c0_22 = arith.constant 0 : index
    %c0_23 = arith.constant 0 : index
    %24 = vector.load %arg15[%c0_21, %c0_22, %c0_23] : memref<4x2x128xf32, #tpu.memory_space<vmem>>, vector<4x2x128xf32>
    tpu.vector_store %arg15[%c0_21, %c0_22, %c0_23], %23 {strides = array<i32>} : memref<4x2x128xf32, #tpu.memory_space<vmem>>, vector<4x2x128xf32>,
    %c0_24 = arith.constant 0 : index
    %c0_25 = arith.constant 0 : index
    %c0_26 = arith.constant 0 : index
    %25 = vector.load %arg4[%c0_24, %c0_25, %c0_26] : memref<2x32x128xbf16, #tpu.memory_space<vmem>>, vector<1x32x128xbf16>
    %26 = vector.shape_cast %25 : vector<1x32x128xbf16> to vector<32x128xbf16>
    %c1_27 = arith.constant 1 : index
    %c0_28 = arith.constant 0 : index
    %c0_29 = arith.constant 0 : index
    %27 = vector.load %arg4[%c1_27, %c0_28, %c0_29] : memref<2x32x128xbf16, #tpu.memory_space<vmem>>, vector<1x32x128xbf16>
    %28 = vector.shape_cast %27 : vector<1x32x128xbf16> to vector<32x128xbf16>
    %c0_30 = arith.constant 0 : index
    %c0_31 = arith.constant 0 : index
    %29 = vector.load %arg10[%c0_30, %c0_31] : memref<2x32xf32, #tpu.memory_space<vmem>>, vector<2x32xf32>
    %c0_32 = arith.constant 0 : index
    %c0_33 = arith.constant 0 : index
    %30 = vector.load %arg11[%c0_32, %c0_33] : memref<2x32xf32, #tpu.memory_space<vmem>>, vector<2x32xf32>
    %c0_34 = arith.constant 0 : index
    %c0_35 = arith.constant 0 : index
    %31 = vector.load %arg12[%c0_34, %c0_35] : memref<2x32xf32, #tpu.memory_space<vmem>>, vector<2x32xf32>
    %c0_36 = arith.constant 0 : index
    %c0_37 = arith.constant 0 : index
    %32 = vector.load %arg13[%c0_36, %c0_37] : memref<2x32xf32, #tpu.memory_space<vmem>>, vector<2x32xf32>
    %c0_i32_38 = arith.constant 0 : i32
    %c4_i32 = arith.constant 4 : i32
    %33 = arith.addi %c0_i32_38, %c4_i32 : i32
    %c1_i32 = arith.constant 1 : i32
    %34:4 = scf.for %arg16 = %c0_i32_38 to %33 step %c1_i32 iter_args(%arg17 = %29, %arg18 = %30, %arg19 = %31, %arg20 = %32) -> (vector<2x32xf32>, vector<2x32xf32>, vector<2x32xf32>, vector<2x32xf32>)  : i32 {
      %c3_i32 = arith.constant 3 : i32
      %42 = arith.subi %c3_i32, %arg16 : i32
      %43 = arith.index_cast %arg16 : i32 to index
      %c0_50 = arith.constant 0 : index
      %c0_51 = arith.constant 0 : index
      %44 = vector.load %arg14[%43, %c0_50, %c0_51] : memref<4x2x128xf32, #tpu.memory_space<vmem>>, vector<1x2x128xf32>
      %45 = vector.shape_cast %44 : vector<1x2x128xf32> to vector<2x128xf32>
      %46 = arith.truncf %arg17 : vector<2x32xf32> to vector<2x32xbf16>
      %cst_52 = arith.constant dense<0.000000e+00> : vector<2x128xf32>
      %47 = tpu.matmul %46, %26, %cst_52 {dimension_numbers = #tpu.dot_dimension_numbers<[1], [0], [0], [1], [0, 0, 1, 1], [], []>} : vector<2x32xbf16>, vector<32x128xbf16>, vector<2x128xf32> -> vector<2x128xf32>
      %48 = arith.addf %45, %47 : vector<2x128xf32>
      %49 = vector.extract_strided_slice %48 {offsets = [0, 0], sizes = [2, 32], strides = [1, 1]} : vector<2x128xf32> to vector<2x32xf32>
      %50 = arith.negf %49 : vector<2x32xf32>
      %51 = math.exp %50 : vector<2x32xf32>
      %cst_53 = arith.constant 1.000000e+00 : f32
      %52 = vector.broadcast %cst_53 : f32 to vector<2x32xf32>
      %53 = arith.addf %52, %51 : vector<2x32xf32>
      %54 = arith.divf %52, %53 : vector<2x32xf32>
      %55 = vector.extract_strided_slice %48 {offsets = [0, 32], sizes = [2, 32], strides = [1, 1]} : vector<2x128xf32> to vector<2x32xf32>
      %56 = arith.negf %55 : vector<2x32xf32>
      %57 = math.exp %56 : vector<2x32xf32>
      %cst_54 = arith.constant 1.000000e+00 : f32
      %58 = vector.broadcast %cst_54 : f32 to vector<2x32xf32>
      %59 = arith.addf %58, %57 : vector<2x32xf32>
      %60 = arith.divf %58, %59 : vector<2x32xf32>
      %61 = vector.extract_strided_slice %48 {offsets = [0, 64], sizes = [2, 32], strides = [1, 1]} : vector<2x128xf32> to vector<2x32xf32>
      %62 = math.tanh %61 : vector<2x32xf32>
      %63 = vector.extract_strided_slice %48 {offsets = [0, 96], sizes = [2, 32], strides = [1, 1]} : vector<2x128xf32> to vector<2x32xf32>
      %64 = arith.negf %63 : vector<2x32xf32>
      %65 = math.exp %64 : vector<2x32xf32>
      %cst_55 = arith.constant 1.000000e+00 : f32
      %66 = vector.broadcast %cst_55 : f32 to vector<2x32xf32>
      %67 = arith.addf %66, %65 : vector<2x32xf32>
      %68 = arith.divf %66, %67 : vector<2x32xf32>
      %69 = arith.mulf %60, %arg18 : vector<2x32xf32>
      %70 = arith.mulf %54, %62 : vector<2x32xf32>
      %71 = arith.addf %69, %70 : vector<2x32xf32>
      %72 = math.tanh %71 : vector<2x32xf32>
      %73 = arith.mulf %68, %72 : vector<2x32xf32>
      %74 = arith.index_cast %42 : i32 to index
      %c0_56 = arith.constant 0 : index
      %c0_57 = arith.constant 0 : index
      %75 = vector.load %arg15[%74, %c0_56, %c0_57] : memref<4x2x128xf32, #tpu.memory_space<vmem>>, vector<1x2x128xf32>
      %76 = vector.shape_cast %75 : vector<1x2x128xf32> to vector<2x128xf32>
      %77 = arith.truncf %arg19 : vector<2x32xf32> to vector<2x32xbf16>
      %cst_58 = arith.constant dense<0.000000e+00> : vector<2x128xf32>
      %78 = tpu.matmul %77, %28, %cst_58 {dimension_numbers = #tpu.dot_dimension_numbers<[1], [0], [0], [1], [0, 0, 1, 1], [], []>} : vector<2x32xbf16>, vector<32x128xbf16>, vector<2x128xf32> -> vector<2x128xf32>
      %79 = arith.addf %76, %78 : vector<2x128xf32>
      %80 = vector.extract_strided_slice %79 {offsets = [0, 0], sizes = [2, 32], strides = [1, 1]} : vector<2x128xf32> to vector<2x32xf32>
      %81 = arith.negf %80 : vector<2x32xf32>
      %82 = math.exp %81 : vector<2x32xf32>
      %cst_59 = arith.constant 1.000000e+00 : f32
      %83 = vector.broadcast %cst_59 : f32 to vector<2x32xf32>
      %84 = arith.addf %83, %82 : vector<2x32xf32>
      %85 = arith.divf %83, %84 : vector<2x32xf32>
      %86 = vector.extract_strided_slice %79 {offsets = [0, 32], sizes = [2, 32], strides = [1, 1]} : vector<2x128xf32> to vector<2x32xf32>
      %87 = arith.negf %86 : vector<2x32xf32>
      %88 = math.exp %87 : vector<2x32xf32>
      %cst_60 = arith.constant 1.000000e+00 : f32
      %89 = vector.broadcast %cst_60 : f32 to vector<2x32xf32>
      %90 = arith.addf %89, %88 : vector<2x32xf32>
      %91 = arith.divf %89, %90 : vector<2x32xf32>
      %92 = vector.extract_strided_slice %79 {offsets = [0, 64], sizes = [2, 32], strides = [1, 1]} : vector<2x128xf32> to vector<2x32xf32>
      %93 = math.tanh %92 : vector<2x32xf32>
      %94 = vector.extract_strided_slice %79 {offsets = [0, 96], sizes = [2, 32], strides = [1, 1]} : vector<2x128xf32> to vector<2x32xf32>
      %95 = arith.negf %94 : vector<2x32xf32>
      %96 = math.exp %95 : vector<2x32xf32>
      %cst_61 = arith.constant 1.000000e+00 : f32
      %97 = vector.broadcast %cst_61 : f32 to vector<2x32xf32>
      %98 = arith.addf %97, %96 : vector<2x32xf32>
      %99 = arith.divf %97, %98 : vector<2x32xf32>
      %100 = arith.mulf %91, %arg20 : vector<2x32xf32>
      %101 = arith.mulf %85, %93 : vector<2x32xf32>
      %102 = arith.addf %100, %101 : vector<2x32xf32>
      %103 = math.tanh %102 : vector<2x32xf32>
      %104 = arith.mulf %99, %103 : vector<2x32xf32>
      %105 = arith.index_cast %arg16 : i32 to index
      %c0_62 = arith.constant 0 : index
      %c0_63 = arith.constant 0 : index
      %106 = vector.load %arg6[%105, %c0_62, %c0_63] : memref<4x2x32xf32, #tpu.memory_space<vmem>>, vector<1x2x32xf32>
      %107 = vector.shape_cast %106 : vector<1x2x32xf32> to vector<2x32xf32>
      %108 = vector.shape_cast %73 : vector<2x32xf32> to vector<1x2x32xf32>
      tpu.vector_store %arg6[%105, %c0_62, %c0_63], %108 {strides = array<i32>} : memref<4x2x32xf32, #tpu.memory_space<vmem>>, vector<1x2x32xf32>,
      %109 = arith.index_cast %42 : i32 to index
      %c0_64 = arith.constant 0 : index
      %c0_65 = arith.constant 0 : index
      %110 = vector.load %arg7[%109, %c0_64, %c0_65] : memref<4x2x32xf32, #tpu.memory_space<vmem>>, vector<1x2x32xf32>
      %111 = vector.shape_cast %110 : vector<1x2x32xf32> to vector<2x32xf32>
      %112 = vector.shape_cast %104 : vector<2x32xf32> to vector<1x2x32xf32>
      tpu.vector_store %arg7[%109, %c0_64, %c0_65], %112 {strides = array<i32>} : memref<4x2x32xf32, #tpu.memory_space<vmem>>, vector<1x2x32xf32>,
      scf.yield %73, %71, %104, %102 : vector<2x32xf32>, vector<2x32xf32>, vector<2x32xf32>, vector<2x32xf32>
    }
    %c4_i32_39 = arith.constant 4 : i32
    %c0_40 = arith.constant 0 : index
    %c0_41 = arith.constant 0 : index
    %35 = vector.load %arg10[%c0_40, %c0_41] : memref<2x32xf32, #tpu.memory_space<vmem>>, vector<2x32xf32>
    tpu.vector_store %arg10[%c0_40, %c0_41], %34#0 {strides = array<i32>} : memref<2x32xf32, #tpu.memory_space<vmem>>, vector<2x32xf32>,
    %c0_42 = arith.constant 0 : index
    %c0_43 = arith.constant 0 : index
    %36 = vector.load %arg11[%c0_42, %c0_43] : memref<2x32xf32, #tpu.memory_space<vmem>>, vector<2x32xf32>
    tpu.vector_store %arg11[%c0_42, %c0_43], %34#1 {strides = array<i32>} : memref<2x32xf32, #tpu.memory_space<vmem>>, vector<2x32xf32>,
    %c0_44 = arith.constant 0 : index
    %c0_45 = arith.constant 0 : index
    %37 = vector.load %arg12[%c0_44, %c0_45] : memref<2x32xf32, #tpu.memory_space<vmem>>, vector<2x32xf32>
    tpu.vector_store %arg12[%c0_44, %c0_45], %34#2 {strides = array<i32>} : memref<2x32xf32, #tpu.memory_space<vmem>>, vector<2x32xf32>,
    %c0_46 = arith.constant 0 : index
    %c0_47 = arith.constant 0 : index
    %38 = vector.load %arg13[%c0_46, %c0_47] : memref<2x32xf32, #tpu.memory_space<vmem>>, vector<2x32xf32>
    tpu.vector_store %arg13[%c0_46, %c0_47], %34#3 {strides = array<i32>} : memref<2x32xf32, #tpu.memory_space<vmem>>, vector<2x32xf32>,
    %c1_i32_48 = arith.constant 1 : i32
    %39 = arith.cmpi eq, %arg0, %c1_i32_48 : i32
    %40 = arith.extui %39 : i1 to i32
    %c0_i32_49 = arith.constant 0 : i32
    %41 = arith.cmpi ne, %40, %c0_i32_49 : i32
    scf.if %41 {
      %c0_50 = arith.constant 0 : index
      %c0_51 = arith.constant 0 : index
      %c0_52 = arith.constant 0 : index
      %42 = vector.load %arg8[%c0_50, %c0_51, %c0_52] : memref<2x2x32xf32, #tpu.memory_space<vmem>>, vector<1x2x32xf32>
      %43 = vector.shape_cast %42 : vector<1x2x32xf32> to vector<2x32xf32>
      %44 = vector.shape_cast %34#0 : vector<2x32xf32> to vector<1x2x32xf32>
      tpu.vector_store %arg8[%c0_50, %c0_51, %c0_52], %44 {strides = array<i32>} : memref<2x2x32xf32, #tpu.memory_space<vmem>>, vector<1x2x32xf32>,
      %c1_53 = arith.constant 1 : index
      %c0_54 = arith.constant 0 : index
      %c0_55 = arith.constant 0 : index
      %45 = vector.load %arg8[%c1_53, %c0_54, %c0_55] : memref<2x2x32xf32, #tpu.memory_space<vmem>>, vector<1x2x32xf32>
      %46 = vector.shape_cast %45 : vector<1x2x32xf32> to vector<2x32xf32>
      %47 = vector.shape_cast %34#2 : vector<2x32xf32> to vector<1x2x32xf32>
      tpu.vector_store %arg8[%c1_53, %c0_54, %c0_55], %47 {strides = array<i32>} : memref<2x2x32xf32, #tpu.memory_space<vmem>>, vector<1x2x32xf32>,
      %c0_56 = arith.constant 0 : index
      %c0_57 = arith.constant 0 : index
      %c0_58 = arith.constant 0 : index
      %48 = vector.load %arg9[%c0_56, %c0_57, %c0_58] : memref<2x2x32xf32, #tpu.memory_space<vmem>>, vector<1x2x32xf32>
      %49 = vector.shape_cast %48 : vector<1x2x32xf32> to vector<2x32xf32>
      %50 = vector.shape_cast %34#1 : vector<2x32xf32> to vector<1x2x32xf32>
      tpu.vector_store %arg9[%c0_56, %c0_57, %c0_58], %50 {strides = array<i32>} : memref<2x2x32xf32, #tpu.memory_space<vmem>>, vector<1x2x32xf32>,
      %c1_59 = arith.constant 1 : index
      %c0_60 = arith.constant 0 : index
      %c0_61 = arith.constant 0 : index
      %51 = vector.load %arg9[%c1_59, %c0_60, %c0_61] : memref<2x2x32xf32, #tpu.memory_space<vmem>>, vector<1x2x32xf32>
      %52 = vector.shape_cast %51 : vector<1x2x32xf32> to vector<2x32xf32>
      %53 = vector.shape_cast %34#3 : vector<2x32xf32> to vector<1x2x32xf32>
      tpu.vector_store %arg9[%c1_59, %c0_60, %c0_61], %53 {strides = array<i32>} : memref<2x2x32xf32, #tpu.memory_space<vmem>>, vector<1x2x32xf32>,
    } else {
    }
    return
  }
  func.func @transform_0(%arg0: i32) -> (i32, i32, i32) {
    %c0_i32 = arith.constant 0 : i32
    %c0_i32_0 = arith.constant 0 : i32
    %c0_i32_1 = arith.constant 0 : i32
    return %arg0, %c0_i32, %c0_i32_0 : i32, i32, i32
  }
  func.func @transform_1(%arg0: i32) -> (i32, i32, i32) {
    %c1_i32 = arith.constant 1 : i32
    %0 = arith.subi %c1_i32, %arg0 : i32
    %c0_i32 = arith.constant 0 : i32
    %c0_i32_0 = arith.constant 0 : i32
    %c0_i32_1 = arith.constant 0 : i32
    return %0, %c0_i32, %c0_i32_0 : i32, i32, i32
  }
  func.func @transform_2(%arg0: i32) -> (i32, i32, i32) {
    %c0_i32 = arith.constant 0 : i32
    %c0_i32_0 = arith.constant 0 : i32
    %c0_i32_1 = arith.constant 0 : i32
    %c0_i32_2 = arith.constant 0 : i32
    return %c0_i32, %c0_i32_0, %c0_i32_1 : i32, i32, i32
  }
  func.func @transform_3(%arg0: i32) -> (i32, i32, i32) {
    %c0_i32 = arith.constant 0 : i32
    %c0_i32_0 = arith.constant 0 : i32
    %c0_i32_1 = arith.constant 0 : i32
    %c0_i32_2 = arith.constant 0 : i32
    return %c0_i32, %c0_i32_0, %c0_i32_1 : i32, i32, i32
  }
  func.func @transform_4(%arg0: i32) -> (i32, i32, i32) {
    %c0_i32 = arith.constant 0 : i32
    %c0_i32_0 = arith.constant 0 : i32
    %c0_i32_1 = arith.constant 0 : i32
    %c0_i32_2 = arith.constant 0 : i32
    return %c0_i32, %c0_i32_0, %c0_i32_1 : i32, i32, i32
  }
  func.func @transform_5(%arg0: i32) -> (i32, i32, i32) {
    %c0_i32 = arith.constant 0 : i32
    %c0_i32_0 = arith.constant 0 : i32
    %c0_i32_1 = arith.constant 0 : i32
    return %arg0, %c0_i32, %c0_i32_0 : i32, i32, i32
  }
  func.func @transform_6(%arg0: i32) -> (i32, i32, i32) {
    %c1_i32 = arith.constant 1 : i32
    %0 = arith.subi %c1_i32, %arg0 : i32
    %c0_i32 = arith.constant 0 : i32
    %c0_i32_0 = arith.constant 0 : i32
    %c0_i32_1 = arith.constant 0 : i32
    return %0, %c0_i32, %c0_i32_0 : i32, i32, i32
  }
  func.func @transform_7(%arg0: i32) -> (i32, i32, i32) {
    %c0_i32 = arith.constant 0 : i32
    %c0_i32_0 = arith.constant 0 : i32
    %c0_i32_1 = arith.constant 0 : i32
    %c0_i32_2 = arith.constant 0 : i32
    return %c0_i32, %c0_i32_0, %c0_i32_1 : i32, i32, i32
  }
  func.func @transform_8(%arg0: i32) -> (i32, i32, i32) {
    %c0_i32 = arith.constant 0 : i32
    %c0_i32_0 = arith.constant 0 : i32
    %c0_i32_1 = arith.constant 0 : i32
    %c0_i32_2 = arith.constant 0 : i32
    return %c0_i32, %c0_i32_0, %c0_i32_1 : i32, i32, i32
  }
}

</mosaic_0001>

<llo_original>
// kernel: tpu_custom_call.1
$region0: #{tpu_custom_call.1}
  #allocation0 [shape = 'u32[]', space=smem, size = 0x4, offset = 0x4, fixed_abs, tag = 'smem constant byte address 0x4 - core index']
  #allocation1 [shape = 'u32[72,128]{1,0:T(1,128)}', space=vmem, size = 0x9000, scoped, tag = 'internal scratch']
  #allocation2 [shape = 'f32[2,32]{1,0:T(2,128)}', space=vmem, size = 0x400, scoped, tag = 'scratch operand']
  #allocation3 [shape = 'f32[2,32]{1,0:T(2,128)}', space=vmem, size = 0x400, scoped, tag = 'scratch operand']
  #allocation4 [shape = 'f32[2,32]{1,0:T(2,128)}', space=vmem, size = 0x400, scoped, tag = 'scratch operand']
  #allocation5 [shape = 'f32[2,32]{1,0:T(2,128)}', space=vmem, size = 0x400, scoped, tag = 'scratch operand']
  #allocation6 [shape = 'f32[4,2,128]{2,1,0:T(2,128)}', space=vmem, size = 0x1000, scoped, tag = 'scratch operand']
  #allocation7 [shape = 'f32[4,2,128]{2,1,0:T(2,128)}', space=vmem, size = 0x1000, scoped, tag = 'scratch operand']
  %s0 = inlined_call_operand.hbm [shape: bf16[8,2,16], index: 0, kind: input, shape index: {}]
  %s1 = inlined_call_operand.hbm [shape: bf16[8,2,16], index: 1, kind: input, shape index: {}]
  %s2 = inlined_call_operand.hbm [shape: bf16[2,16,128], index: 2, kind: input, shape index: {}]
  %s3 = inlined_call_operand.hbm [shape: bf16[2,32,128], index: 3, kind: input, shape index: {}]
  %s4 = inlined_call_operand.vmem [shape: f32[2,1,128], index: 4, kind: input, shape index: {}]
  %s5 = inlined_call_operand.hbm [shape: f32[8,2,32], index: 5, kind: output, shape index: {0}]
  %s6 = inlined_call_operand.hbm [shape: f32[8,2,32], index: 6, kind: output, shape index: {1}]
  %s7 = inlined_call_operand.hbm [shape: f32[2,2,32], index: 7, kind: output, shape index: {2}]
  %s8 = inlined_call_operand.hbm [shape: f32[2,2,32], index: 8, kind: output, shape index: {3}]
  %9 = xla_tuple %s5, %s6, %s7, %s8
  %s10 = sld [smem:[#allocation0]]
  $region108: #{tpu_custom_call.1} parent=0
    _
  %s12 = ssub.s32 1, %s10
  %s13 = scalar_select 0, %s12, %s10
  $region1: #{tpu_custom_call.1} parent=0
    #allocation8 [shape = 'u8[4096]{0}', space=vmem, size = 0x1000, scoped, tag = 'input window, operand 0']
    #allocation9 [shape = 's32[2]{0}', space=sflag, size = 0x8, scoped, tag = 'scoped memory for tpu_custom_call.1']
    #allocation10 [shape = 's32[2]{0}', space=sflag, size = 0x8, scoped, tag = 'scoped memory for tpu_custom_call.1']
    #allocation11 [shape = 'u8[4096]{0}', space=vmem, size = 0x1000, scoped, tag = 'input window, operand 1']
    #allocation12 [shape = 's32[2]{0}', space=sflag, size = 0x8, scoped, tag = 'scoped memory for tpu_custom_call.1']
    #allocation13 [shape = 'u8[8192]{0}', space=vmem, size = 0x2000, scoped, tag = 'input window, operand 2, single buffered']
    #allocation14 [shape = 'u8[16384]{0}', space=vmem, size = 0x4000, scoped, tag = 'input window, operand 3, single buffered']
    #allocation15 [shape = 's32[1]{0}', space=sflag, size = 0x4, scoped, tag = 'scoped memory for tpu_custom_call.1']
    #allocation16 [shape = 'u8[8192]{0}', space=vmem, size = 0x2000, scoped, tag = 'output window, operand 0']
    #allocation17 [shape = 'u8[8192]{0}', space=vmem, size = 0x2000, scoped, tag = 'output window, operand 1']
    #allocation18 [shape = 's32[2]{0}', space=sflag, size = 0x8, scoped, tag = 'scoped memory for tpu_custom_call.1']
    #allocation19 [shape = 'u8[2048]{0}', space=vmem, size = 0x800, scoped, tag = 'output window, operand 2, single buffered']
    #allocation20 [shape = 'u8[2048]{0}', space=vmem, size = 0x800, scoped, tag = 'output window, operand 3, single buffered']
    #allocation21 [shape = 's32[1]{0}', space=sflag, size = 0x4, scoped, tag = 'scoped memory for tpu_custom_call.1']
    %14 = vsyncpa [#allocation9], 0
    %s15 = scalar_lea.sflag [#allocation9], 1
    %16 = vsyncpa %s15, 0
    %17 = vsyncpa [#allocation12], 0
    %s18 = scalar_lea.sflag [#allocation12], 1
    %19 = vsyncpa %s18, 0
    %20 = vsyncpa [#allocation15], 0
    %21 = vsyncpa [#allocation10], 0
    %s22 = scalar_lea.sflag [#allocation10], 1
    %23 = vsyncpa %s22, 0
    %24 = vsyncpa [#allocation18], 0
    %s25 = scalar_lea.sflag [#allocation18], 1
    %26 = vsyncpa %s25, 0
    %27 = vsyncpa [#allocation21], 0
    loop: start=0, step=1, limit=4
    $region2: #{tpu_custom_call.1} parent=1 // loop_pre_header
      _
    $region3: #{tpu_custom_call.1} parent=1 // loop_header
      %s29 = sphi 0, %s33
      %p30 = scmp.ge.s32.totalorder %s29, 4
      %s39 = sphi 0, %s41
      %s42 = sphi 0, %s39
      %s43 = sphi 0, %s42
      %s59 = sphi 0, %s43
      %s67 = sphi 0, %s69
      %s70 = sphi 0, %s67
      %s71 = sphi 0, %s70
      %s87 = sphi 0, %s71
      %s91 = sphi 0, %s91
      %s93 = sphi 0, %s91
      %s94 = sphi 0, %s93
      %s108 = sphi 0, %s94
      %s112 = sphi 0, %s112
      %s114 = sphi 0, %s112
      %s115 = sphi 0, %s114
      %s129 = sphi 0, %s115
      %s133 = sphi 0, %s133
      %s135 = sphi 0, %s133
      %s136 = sphi 0, %s135
      %s150 = sphi 0, %s136
      %s156 = sphi 0, %s158
      %s159 = sphi 0, %s156
      %s160 = sphi 0, %s159
      %s176 = sphi 0, %s160
      %s184 = sphi 0, %s186
      %s187 = sphi 0, %s184
      %s188 = sphi 0, %s187
      %s204 = sphi 0, %s188
      %s208 = sphi 0, %s208
      %s210 = sphi 0, %s208
      %s211 = sphi 0, %s210
      %s225 = sphi 0, %s211
      %s229 = sphi 0, %s229
      %s231 = sphi 0, %s229
      %s232 = sphi 0, %s231
      %s246 = sphi 0, %s232
    $region4: #{tpu_custom_call.1} parent=1 // loop_header_branch
      %32 = sbr.rel (%p30) target = $region8
    $region5: #{tpu_custom_call.1} parent=1 // loop_body
      %s34 = ssub.s32 %s29, 1
      %s35 = ssub.s32 %s29, 2
      %s36 = sadd.s32 %s29, 1
      %s37 = ssub.s32 %s29, %s36
      %p38 = scmp.eq.s32.totalorder %s37, 0
      %s40 = sadd.s32 %s39, 1
      %s41 = scalar_select %p38, %s39, %s40
      %p44 = pneg %p38
      %p45 = scmp.eq.s32.totalorder %s29, 1
      %p46 = por %p44, %p45
      %p47 = scmp.ne.s32.totalorder %s39, %s42
      %p48 = scmp.eq.s32.totalorder %s29, 0
      %p49 = por %p47, %p48
      %p50 = scmp.ne.s32.totalorder %s39, %s42
      %p51 = scmp.eq.s32.totalorder %s34, 1
      %p52 = por %p50, %p51
      %p53 = scmp.ne.s32.totalorder %s42, %s43
      %p54 = scmp.eq.s32.totalorder %s34, 0
      %p55 = por %p53, %p54
      %p56 = scmp.ne.s32.totalorder %s42, %s43
      %p57 = scmp.eq.s32.totalorder %s35, 1
      %p58 = por %p56, %p57
      %p60 = scmp.ne.s32.totalorder %s43, %s59
      %p61 = scmp.eq.s32.totalorder %s35, 0
      %p62 = por %p60, %p61
      %s63 = ssub.s32 1, %s29
      %s64 = ssub.s32 1, %s36
      %s65 = ssub.s32 %s63, %s64
      %p66 = scmp.eq.s32.totalorder %s65, 0
      %s68 = sadd.s32 %s67, 1
      %s69 = scalar_select %p66, %s67, %s68
      %p72 = pneg %p66
      %p73 = scmp.eq.s32.totalorder %s29, 1
      %p74 = por %p72, %p73
      %p75 = scmp.ne.s32.totalorder %s67, %s70
      %p76 = scmp.eq.s32.totalorder %s29, 0
      %p77 = por %p75, %p76
      %p78 = scmp.ne.s32.totalorder %s67, %s70
      %p79 = scmp.eq.s32.totalorder %s34, 1
      %p80 = por %p78, %p79
      %p81 = scmp.ne.s32.totalorder %s70, %s71
      %p82 = scmp.eq.s32.totalorder %s34, 0
      %p83 = por %p81, %p82
      %p84 = scmp.ne.s32.totalorder %s70, %s71
      %p85 = scmp.eq.s32.totalorder %s35, 1
      %p86 = por %p84, %p85
      %p88 = scmp.ne.s32.totalorder %s71, %s87
      %p89 = scmp.eq.s32.totalorder %s35, 0
      %p90 = por %p88, %p89
      %s92 = sadd.s32 %s91, 1
      %p95 = scmp.eq.s32.totalorder %s29, 1
      %p96 = scmp.ne.s32.totalorder %s91, %s93
      %p97 = scmp.eq.s32.totalorder %s29, 0
      %p98 = por %p96, %p97
      %p99 = scmp.ne.s32.totalorder %s91, %s93
      %p100 = scmp.eq.s32.totalorder %s34, 1
      %p101 = por %p99, %p100
      %p102 = scmp.ne.s32.totalorder %s93, %s94
      %p103 = scmp.eq.s32.totalorder %s34, 0
      %p104 = por %p102, %p103
      %p105 = scmp.ne.s32.totalorder %s93, %s94
      %p106 = scmp.eq.s32.totalorder %s35, 1
      %p107 = por %p105, %p106
      %p109 = scmp.ne.s32.totalorder %s94, %s108
      %p110 = scmp.eq.s32.totalorder %s35, 0
      %p111 = por %p109, %p110
      %s113 = sadd.s32 %s112, 1
      %p116 = scmp.eq.s32.totalorder %s29, 1
      %p117 = scmp.ne.s32.totalorder %s112, %s114
      %p118 = scmp.eq.s32.totalorder %s29, 0
      %p119 = por %p117, %p118
      %p120 = scmp.ne.s32.totalorder %s112, %s114
      %p121 = scmp.eq.s32.totalorder %s34, 1
      %p122 = por %p120, %p121
      %p123 = scmp.ne.s32.totalorder %s114, %s115
      %p124 = scmp.eq.s32.totalorder %s34, 0
      %p125 = por %p123, %p124
      %p126 = scmp.ne.s32.totalorder %s114, %s115
      %p127 = scmp.eq.s32.totalorder %s35, 1
      %p128 = por %p126, %p127
      %p130 = scmp.ne.s32.totalorder %s115, %s129
      %p131 = scmp.eq.s32.totalorder %s35, 0
      %p132 = por %p130, %p131
      %s134 = sadd.s32 %s133, 1
      %p137 = scmp.eq.s32.totalorder %s29, 1
      %p138 = scmp.ne.s32.totalorder %s133, %s135
      %p139 = scmp.eq.s32.totalorder %s29, 0
      %p140 = por %p138, %p139
      %p141 = scmp.ne.s32.totalorder %s133, %s135
      %p142 = scmp.eq.s32.totalorder %s34, 1
      %p143 = por %p141, %p142
      %p144 = scmp.ne.s32.totalorder %s135, %s136
      %p145 = scmp.eq.s32.totalorder %s34, 0
      %p146 = por %p144, %p145
      %p147 = scmp.ne.s32.totalorder %s135, %s136
      %p148 = scmp.eq.s32.totalorder %s35, 1
      %p149 = por %p147, %p148
      %p151 = scmp.ne.s32.totalorder %s136, %s150
      %p152 = scmp.eq.s32.totalorder %s35, 0
      %p153 = por %p151, %p152
      %s154 = ssub.s32 %s29, %s36
      %p155 = scmp.eq.s32.totalorder %s154, 0
      %s157 = sadd.s32 %s156, 1
      %s158 = scalar_select %p155, %s156, %s157
      %p161 = pneg %p155
      %p162 = scmp.eq.s32.totalorder %s29, 1
      %p163 = por %p161, %p162
      %p164 = scmp.ne.s32.totalorder %s156, %s159
      %p165 = scmp.eq.s32.totalorder %s29, 0
      %p166 = por %p164, %p165
      %p167 = scmp.ne.s32.totalorder %s156, %s159
      %p168 = scmp.eq.s32.totalorder %s34, 1
      %p169 = por %p167, %p168
      %p170 = scmp.ne.s32.totalorder %s159, %s160
      %p171 = scmp.eq.s32.totalorder %s34, 0
      %p172 = por %p170, %p171
      %p173 = scmp.ne.s32.totalorder %s159, %s160
      %p174 = scmp.eq.s32.totalorder %s35, 1
      %p175 = por %p173, %p174
      %p177 = scmp.ne.s32.totalorder %s160, %s176
      %p178 = scmp.eq.s32.totalorder %s35, 0
      %p179 = por %p177, %p178
      %s180 = ssub.s32 1, %s29
      %s181 = ssub.s32 1, %s36
      %s182 = ssub.s32 %s180, %s181
      %p183 = scmp.eq.s32.totalorder %s182, 0
      %s185 = sadd.s32 %s184, 1
      %s186 = scalar_select %p183, %s184, %s185
      %p189 = pneg %p183
      %p190 = scmp.eq.s32.totalorder %s29, 1
      %p191 = por %p189, %p190
      %p192 = scmp.ne.s32.totalorder %s184, %s187
      %p193 = scmp.eq.s32.totalorder %s29, 0
      %p194 = por %p192, %p193
      %p195 = scmp.ne.s32.totalorder %s184, %s187
      %p196 = scmp.eq.s32.totalorder %s34, 1
      %p197 = por %p195, %p196
      %p198 = scmp.ne.s32.totalorder %s187, %s188
      %p199 = scmp.eq.s32.totalorder %s34, 0
      %p200 = por %p198, %p199
      %p201 = scmp.ne.s32.totalorder %s187, %s188
      %p202 = scmp.eq.s32.totalorder %s35, 1
      %p203 = por %p201, %p202
      %p205 = scmp.ne.s32.totalorder %s188, %s204
      %p206 = scmp.eq.s32.totalorder %s35, 0
      %p207 = por %p205, %p206
      %s209 = sadd.s32 %s208, 1
      %p212 = scmp.eq.s32.totalorder %s29, 1
      %p213 = scmp.ne.s32.totalorder %s208, %s210
      %p214 = scmp.eq.s32.totalorder %s29, 0
      %p215 = por %p213, %p214
      %p216 = scmp.ne.s32.totalorder %s208, %s210
      %p217 = scmp.eq.s32.totalorder %s34, 1
      %p218 = por %p216, %p217
      %p219 = scmp.ne.s32.totalorder %s210, %s211
      %p220 = scmp.eq.s32.totalorder %s34, 0
      %p221 = por %p219, %p220
      %p222 = scmp.ne.s32.totalorder %s210, %s211
      %p223 = scmp.eq.s32.totalorder %s35, 1
      %p224 = por %p222, %p223
      %p226 = scmp.ne.s32.totalorder %s211, %s225
      %p227 = scmp.eq.s32.totalorder %s35, 0
      %p228 = por %p226, %p227
      %s230 = sadd.s32 %s229, 1
      %p233 = scmp.eq.s32.totalorder %s29, 1
      %p234 = scmp.ne.s32.totalorder %s229, %s231
      %p235 = scmp.eq.s32.totalorder %s29, 0
      %p236 = por %p234, %p235
      %p237 = scmp.ne.s32.totalorder %s229, %s231
      %p238 = scmp.eq.s32.totalorder %s34, 1
      %p239 = por %p237, %p238
      %p240 = scmp.ne.s32.totalorder %s231, %s232
      %p241 = scmp.eq.s32.totalorder %s34, 0
      %p242 = por %p240, %p241
      %p243 = scmp.ne.s32.totalorder %s231, %s232
      %p244 = scmp.eq.s32.totalorder %s35, 1
      %p245 = por %p243, %p244
      %p247 = scmp.ne.s32.totalorder %s232, %s246
      %p248 = scmp.eq.s32.totalorder %s35, 0
      %p249 = por %p247, %p248
      %p250 = scmp.le.s32.totalorder 1, %s29
      %p251 = scmp.lt.s32.totalorder %s29, 3
      %p252 = pnand %p250, %p251
      %p253 = pneg %p252
      // Predicated region
      $region9: #{tpu_custom_call.1} parent=5 // pred_check
        _
      $region10: #{tpu_custom_call.1} parent=5 // pred_check_branch
        %255 = sbr.rel (%p252) target = $region12
      $region11: #{tpu_custom_call.1} parent=5 // pred_region
        %s256 = ssub.s32 %s29, 1
        // Predicated region
        $region13: #{tpu_custom_call.1} parent=11 // pred_check
          %p257 = pneg %p104
        $region14: #{tpu_custom_call.1} parent=11 // pred_check_branch
          %259 = sbr.rel (%p257) target = $region16
        $region15: #{tpu_custom_call.1} parent=11 // pred_region
          %261 = vsyncadd [#allocation12], 0
          %s262 = sshll.u32 %s2, 4
          %s263 = int_to_ptr.hbm [resolvable:$true] %s262
          %s264 = sshll.u32 [#allocation13], 4
          %s265 = int_to_ptr.vmem [resolvable:$true] %s264
          %270 = dma.hbm_to_vmem [thread:$0]  %s263, 256, %s265, [#allocation12], 64, 64, 4
        $region16: #{tpu_custom_call.1} parent=11 // pred_fallthru
          _
        // Predicated region
        $region17: #{tpu_custom_call.1} parent=11 // pred_check
          %p271 = pneg %p125
        $region18: #{tpu_custom_call.1} parent=11 // pred_check_branch
          %273 = sbr.rel (%p271) target = $region20
        $region19: #{tpu_custom_call.1} parent=11 // pred_region
          %275 = vsyncadd [#allocation15], 0
          %s276 = sshll.u32 %s3, 4
          %s277 = int_to_ptr.hbm [resolvable:$true] %s276
          %s278 = sshll.u32 [#allocation14], 4
          %s279 = int_to_ptr.vmem [resolvable:$true] %s278
          %284 = dma.hbm_to_vmem [thread:$0]  %s277, 512, %s279, [#allocation15], 64, 64, 4
        $region20: #{tpu_custom_call.1} parent=11 // pred_fallthru
          _
        // Predicated region
        $region21: #{tpu_custom_call.1} parent=11 // pred_check
          %p285 = pneg %p146
        $region22: #{tpu_custom_call.1} parent=11 // pred_check_branch
          %287 = sbr.rel (%p285) target = $region24
        $region23: #{tpu_custom_call.1} parent=11 // pred_region
          _
        $region24: #{tpu_custom_call.1} parent=11 // pred_fallthru
          _
      $region12: #{tpu_custom_call.1} parent=5 // pred_fallthru
        _
      %p288 = scmp.lt.s32.totalorder %s29, 2
      // Predicated region
      $region25: #{tpu_custom_call.1} parent=5 // pred_check
        %p289 = pneg %p288
      $region26: #{tpu_custom_call.1} parent=5 // pred_check_branch
        %291 = sbr.rel (%p289) target = $region28
      $region27: #{tpu_custom_call.1} parent=5 // pred_region
        // Predicated region
        $region29: #{tpu_custom_call.1} parent=27 // pred_check
          %p292 = pneg %p49
        $region30: #{tpu_custom_call.1} parent=27 // pred_check_branch
          %294 = sbr.rel (%p292) target = $region32
        $region31: #{tpu_custom_call.1} parent=27 // pred_region
          %s295 = sand.u32 %s39, 1
          %s296 = scalar_lea.sflag [#allocation9], %s295
          %s297 = sand.u32 %s39, 1
          %s298 = smul.addr %s297, 4
          %s299 = scalar_lea.vmem [#allocation8], %s298
          %s300 = smul.u32 4, %s29
          %302 = vsyncadd %s296, 0
          %s303 = scalar_lea.hbm %s0, %s300
          %s304 = sshll.u32 %s303, 4
          %s305 = int_to_ptr.hbm [resolvable:$true] %s304
          %s306 = sshll.u32 %s299, 4
          %s307 = int_to_ptr.vmem [resolvable:$true] %s306
          %312 = dma.hbm_to_vmem [thread:$0]  %s305, 64, %s307, %s296, 16, 16, 1
        $region32: #{tpu_custom_call.1} parent=27 // pred_fallthru
          _
        // Predicated region
        $region33: #{tpu_custom_call.1} parent=27 // pred_check
          %p313 = pneg %p77
        $region34: #{tpu_custom_call.1} parent=27 // pred_check_branch
          %315 = sbr.rel (%p313) target = $region36
        $region35: #{tpu_custom_call.1} parent=27 // pred_region
          %s316 = sand.u32 %s29, 1
          %s317 = scalar_lea.sflag [#allocation12], %s316
          %s318 = sand.u32 %s67, 1
          %s319 = smul.addr %s318, 4
          %s320 = scalar_lea.vmem [#allocation11], %s319
          %s321 = ssub.s32 1, %s29
          %s322 = smul.u32 4, %s321
          %324 = vsyncadd %s317, 0
          %s325 = scalar_lea.hbm %s1, %s322
          %s326 = sshll.u32 %s325, 4
          %s327 = int_to_ptr.hbm [resolvable:$true] %s326
          %s328 = sshll.u32 %s320, 4
          %s329 = int_to_ptr.vmem [resolvable:$true] %s328
          %334 = dma.hbm_to_vmem [thread:$0]  %s327, 64, %s329, %s317, 16, 16, 1
        $region36: #{tpu_custom_call.1} parent=27 // pred_fallthru
          _
      $region28: #{tpu_custom_call.1} parent=5 // pred_fallthru
        _
      %p335 = scmp.le.s32.totalorder 1, %s29
      %p336 = scmp.lt.s32.totalorder %s29, 3
      %p337 = pnand %p335, %p336
      %p338 = pneg %p337
      // Predicated region
      $region37: #{tpu_custom_call.1} parent=5 // pred_check
        _
      $region38: #{tpu_custom_call.1} parent=5 // pred_check_branch
        %340 = sbr.rel (%p337) target = $region40
      $region39: #{tpu_custom_call.1} parent=5 // pred_region
        %s341 = ssub.s32 %s29, 1
        %s342 = sand.u32 %s42, 1
        %s343 = scalar_lea.sflag [#allocation9], %s342
        %s344 = sand.u32 %s42, 1
        %s345 = smul.addr %s344, 4
        %s346 = scalar_lea.vmem [#allocation8], %s345
        // Predicated region
        $region41: #{tpu_custom_call.1} parent=39 // pred_check
          %p347 = pneg %p55
        $region42: #{tpu_custom_call.1} parent=39 // pred_check_branch
          %349 = sbr.rel (%p347) target = $region44
        $region43: #{tpu_custom_call.1} parent=39 // pred_region
          %351 = dma.done %s343, 64
        $region44: #{tpu_custom_call.1} parent=39 // pred_fallthru
          _
        %s352 = sand.u32 %s34, 1
        %s353 = scalar_lea.sflag [#allocation12], %s352
        %s354 = sand.u32 %s70, 1
        %s355 = smul.addr %s354, 4
        %s356 = scalar_lea.vmem [#allocation11], %s355
        // Predicated region
        $region45: #{tpu_custom_call.1} parent=39 // pred_check
          %p357 = pneg %p83
        $region46: #{tpu_custom_call.1} parent=39 // pred_check_branch
          %359 = sbr.rel (%p357) target = $region48
        $region47: #{tpu_custom_call.1} parent=39 // pred_region
          %361 = dma.done %s353, 64
        $region48: #{tpu_custom_call.1} parent=39 // pred_fallthru
          _
        // Predicated region
        $region49: #{tpu_custom_call.1} parent=39 // pred_check
          %p362 = pneg %p104
        $region50: #{tpu_custom_call.1} parent=39 // pred_check_branch
          %364 = sbr.rel (%p362) target = $region52
        $region51: #{tpu_custom_call.1} parent=39 // pred_region
          %366 = dma.done [#allocation12], 256
        $region52: #{tpu_custom_call.1} parent=39 // pred_fallthru
          _
        // Predicated region
        $region53: #{tpu_custom_call.1} parent=39 // pred_check
          %p367 = pneg %p125
        $region54: #{tpu_custom_call.1} parent=39 // pred_check_branch
          %369 = sbr.rel (%p367) target = $region56
        $region55: #{tpu_custom_call.1} parent=39 // pred_region
          %371 = dma.done [#allocation15], 512
        $region56: #{tpu_custom_call.1} parent=39 // pred_fallthru
          _
        %s372 = sand.u32 %s42, 1
        %s373 = scalar_lea.sflag [#allocation9], %s372
        %s374 = sand.u32 %s42, 1
        %s375 = smul.addr %s374, 4
        %s376 = scalar_lea.vmem [#allocation8], %s375
        %p377 = pneg %p55
        %p378 = pneg %p52
        %s379 = sand.u32 %s34, 1
        %s380 = scalar_lea.sflag [#allocation12], %s379
        %s381 = sand.u32 %s70, 1
        %s382 = smul.addr %s381, 4
        %s383 = scalar_lea.vmem [#allocation11], %s382
        %p384 = pneg %p83
        %p385 = pneg %p80
        %p386 = pneg %p104
        %p387 = pneg %p101
        %p388 = pneg %p125
        %p389 = pneg %p122
        %p390 = pneg %p146
        %p391 = pneg %p143
        %p392 = pneg %p172
        %p393 = pneg %p169
        %s394 = sand.u32 %s159, 1
        %s395 = scalar_lea.sflag [#allocation10], %s394
        %s396 = sand.u32 %s159, 1
        %s397 = smul.addr %s396, 8
        %s398 = scalar_lea.vmem [#allocation16], %s397
        %p399 = pneg %p200
        %p400 = pneg %p197
        %s401 = sand.u32 %s34, 1
        %s402 = scalar_lea.sflag [#allocation18], %s401
        %s403 = sand.u32 %s187, 1
        %s404 = smul.addr %s403, 8
        %s405 = scalar_lea.vmem [#allocation17], %s404
        %p406 = pneg %p221
        %p407 = pneg %p218
        %p408 = pneg %p242
        %p409 = pneg %p239
        %s410 = smul.u32 4, %s34
        %s411 = ssub.s32 1, %s34
        %s412 = smul.u32 4, %s411
        %s413 = smul.u32 4, %s34
        %s414 = ssub.s32 1, %s34
        %s415 = smul.u32 4, %s414
        %p417 = scmp.eq.s32.totalorder %s34, 0
        // Predicated region
        $region57: #{tpu_custom_call.1} parent=39 // pred_check
          %p418 = pneg %p417
        $region58: #{tpu_custom_call.1} parent=39 // pred_check_branch
          %420 = sbr.rel (%p418) target = $region60
        $region59: #{tpu_custom_call.1} parent=39 // pred_region
          %vm421 = vcmask 254976
          %422 = vst.msk [vmem:[#allocation2] sm:$0x3] %vm421, 0.0
          %423 = vst.msk [vmem:[#allocation3] sm:$0x3] %vm421, 0.0
          %424 = vst.msk [vmem:[#allocation4] sm:$0x3] %vm421, 0.0
          %425 = vst.msk [vmem:[#allocation5] sm:$0x3] %vm421, 0.0
        $region60: #{tpu_custom_call.1} parent=39 // pred_fallthru
          _
        %v426 = vld [vmem:[%s346] sm:$0x1]
        %v427 = vld [vmem:[%s346 + $0x1] sm:$0x1]
        %v428 = vld [vmem:[%s346 + $0x2] sm:$0x1]
        %v429 = vld [vmem:[%s346 + $0x3] sm:$0x1]
        %v430 = vld [vmem:[#allocation13] sm:$0xf]
        %v431 = vld [vmem:[#allocation13 + $0x4] sm:$0xf]
        %v432 = vld [vmem:[%s4] sm:$0x1]
        %v434 = vperm.slane %v432, 0
        %437 = vst [vmem:[#allocation1] ss:$9 sm:$0xff] %v426
        %s439 = scalar_lea.vmem [#allocation1], 1
        %440 = vst [vmem:[%s439] ss:$9 sm:$0xff] %v427
        %s442 = scalar_lea.vmem [#allocation1], 2
        %443 = vst [vmem:[%s442] ss:$9 sm:$0xff] %v428
        %s445 = scalar_lea.vmem [#allocation1], 3
        %446 = vst [vmem:[%s445] ss:$9 sm:$0xff] %v429
        %v447 = vld [vmem:[#allocation1] sm:$0xff]
        %v450 = vunpack.c.l.b16 %v430
        %v451 = vunpack.c.l.b16 %v431
        %v452 = vpack.c.b16 %v451, %v450
        %vm454 = vcmask 130048
        %v455 = vsel %vm454, %v447, 0
        %457 = vmatpush.bf16.msra.mxu0 0
        %458 = vmatpush.bf16.msra.mxu0 0
        %459 = vmatpush.bf16.msra.mxu0 0
        %460 = vmatpush.bf16.msra.mxu0 0
        %461 = vmatpush.bf16.msra.mxu0 0
        %462 = vmatpush.bf16.msra.mxu0 0
        %463 = vmatpush.bf16.msra.mxu0 0
        %464 = vmatpush.bf16.msra.mxu0 %v452
        %465 = vmatmul.bf16.gmra.mxu0 %v455
        %v466 = vpop.f32.mrf.mxu0
        %v467 = vadd.f32 %v434, %v466
        %v468 = vpop.f32.mrf.mxu0
        %469 = vdwg.mxu0
        %v471 = vrot.slane %v467, 2
        %v472 = vrot.slane %v467, 4
        %v473 = vrot.slane %v467, 6
        %477 = vst [vmem:[#allocation6] sm:$0x3] %v467
        %478 = vst [vmem:[#allocation6 + $0x2] sm:$0x3] %v471
        %479 = vst [vmem:[#allocation6 + $0x4] sm:$0x3] %v472
        %480 = vst [vmem:[#allocation6 + $0x6] sm:$0x3] %v473
        %v481 = vld [vmem:[%s356] sm:$0x1]
        %v482 = vld [vmem:[%s356 + $0x1] sm:$0x1]
        %v483 = vld [vmem:[%s356 + $0x2] sm:$0x1]
        %v484 = vld [vmem:[%s356 + $0x3] sm:$0x1]
        %s485 = scalar_lea.vmem [#allocation13], 8
        %v486 = vld [vmem:[%s485] sm:$0xf]
        %v487 = vld [vmem:[%s485 + $0x4] sm:$0xf]
        %s488 = scalar_lea.vmem %s4, 1
        %v489 = vld [vmem:[%s488] sm:$0x1]
        %v491 = vperm.slane %v489, 0
        %494 = vst [vmem:[#allocation1] ss:$9 sm:$0xff] %v481
        %s496 = scalar_lea.vmem [#allocation1], 1
        %497 = vst [vmem:[%s496] ss:$9 sm:$0xff] %v482
        %s499 = scalar_lea.vmem [#allocation1], 2
        %500 = vst [vmem:[%s499] ss:$9 sm:$0xff] %v483
        %s502 = scalar_lea.vmem [#allocation1], 3
        %503 = vst [vmem:[%s502] ss:$9 sm:$0xff] %v484
        %v504 = vld [vmem:[#allocation1] sm:$0xff]
        %v507 = vunpack.c.l.b16 %v486
        %v508 = vunpack.c.l.b16 %v487
        %v509 = vpack.c.b16 %v508, %v507
        %v511 = vsel %vm454, %v504, 0
        %513 = vmatpush.bf16.msra.mxu0 0
        %514 = vmatpush.bf16.msra.mxu0 0
        %515 = vmatpush.bf16.msra.mxu0 0
        %516 = vmatpush.bf16.msra.mxu0 0
        %517 = vmatpush.bf16.msra.mxu0 0
        %518 = vmatpush.bf16.msra.mxu0 0
        %519 = vmatpush.bf16.msra.mxu0 0
        %520 = vmatpush.bf16.msra.mxu0 %v509
        %521 = vmatmul.bf16.gmra.mxu0 %v511
        %v522 = vpop.f32.mrf.mxu0
        %v523 = vadd.f32 %v491, %v522
        %v524 = vpop.f32.mrf.mxu0
        %525 = vdwg.mxu0
        %v527 = vrot.slane %v523, 2
        %v528 = vrot.slane %v523, 4
        %v529 = vrot.slane %v523, 6
        %533 = vst [vmem:[#allocation7] sm:$0x3] %v523
        %534 = vst [vmem:[#allocation7 + $0x2] sm:$0x3] %v527
        %535 = vst [vmem:[#allocation7 + $0x4] sm:$0x3] %v528
        %536 = vst [vmem:[#allocation7 + $0x6] sm:$0x3] %v529
        %v537 = vld [vmem:[#allocation14] sm:$0xf]
        %v538 = vld [vmem:[#allocation14 + $0x4] sm:$0xf]
        %v539 = vld [vmem:[#allocation14 + $0x8] sm:$0xf]
        %v540 = vld [vmem:[#allocation14 + $0xc] sm:$0xf]
        %s541 = scalar_lea.vmem [#allocation14], 16
        %v542 = vld [vmem:[%s541] sm:$0xf]
        %v543 = vld [vmem:[%s541 + $0x4] sm:$0xf]
        %v544 = vld [vmem:[%s541 + $0x8] sm:$0xf]
        %v545 = vld [vmem:[%s541 + $0xc] sm:$0xf]
        %v546 = vld [vmem:[#allocation2] sm:$0x3]
        %v547 = vld [vmem:[#allocation3] sm:$0x3]
        %v548 = vld [vmem:[#allocation4] sm:$0x3]
        %v549 = vld [vmem:[#allocation5] sm:$0x3]
        loop: start=0, step=1, limit=4
        $region61: #{tpu_custom_call.1} parent=39 // loop_pre_header
          _
        $region62: #{tpu_custom_call.1} parent=39 // loop_header
          %s551 = sphi 0, %s555
          %p552 = scmp.ge.s32.totalorder %s551, 4
          %v556 = vphi %v546, %v712
          %v557 = vphi %v547, %v725
          %v558 = vphi %v548, %v719
          %v559 = vphi %v549, %v729
        $region63: #{tpu_custom_call.1} parent=39 // loop_header_branch
          %554 = sbr.rel (%p552) target = $region67
        $region64: #{tpu_custom_call.1} parent=39 // loop_body
          %s560 = ssub.s32 3, %s551
          %s561 = smul.u32 %s551, 2
          %s562 = scalar_lea.vmem [#allocation6], %s561
          %v563 = vld [vmem:[%s562] sm:$0x3]
          %v564 = vpack.c.bf16 %v556, %v556
          %v569 = vunpack.c.l.b16 %v537
          %v570 = vunpack.c.l.b16 %v538
          %v571 = vunpack.c.l.b16 %v539
          %v572 = vunpack.c.l.b16 %v540
          %v573 = vpack.c.b16 %v570, %v569
          %v574 = vpack.c.b16 %v572, %v571
          %vm577 = vcmask 261120
          %v579 = vsel %vm577, %v564, 0
          %581 = vmatpush.bf16.msra.mxu0 0
          %582 = vmatpush.bf16.msra.mxu0 0
          %583 = vmatpush.bf16.msra.mxu0 0
          %584 = vmatpush.bf16.msra.mxu0 0
          %585 = vmatpush.bf16.msra.mxu0 0
          %586 = vmatpush.bf16.msra.mxu0 0
          %587 = vmatpush.bf16.msra.mxu0 %v574
          %588 = vmatpush.bf16.msra.mxu0 %v573
          %589 = vmatmul.bf16.gmra.mxu0 %v579
          %v590 = vpop.f32.mrf.mxu0
          %v591 = vadd.f32 0.0, %v590
          %v592 = vpop.f32.mrf.mxu0
          %593 = vdwg.mxu0
          %v594 = vadd.f32 %v563, %v591
          %v595 = vxor.u32 %v594, 2147483648
          %v596 = vmul.f32 %v595, 1.442695
          %v597 = vpow.pop %v596
          %v598 = vadd.f32 %v597, 1.0
          %v599 = vrcp.pop %v598
          %v600 = vmul.f32 %v598, %v599
          %v601 = vsub.f32 1.0, %v600
          %v602 = vmul.f32 %v599, %v601
          %v603 = vadd.f32 %v599, %v602
          %vm604 = vweird.f32 %v598
          %vm605 = vweird.f32 %v599
          %vm606 = vmor %vm604, %vm605
          %v607 = vsel %vm606, %v599, %v603
          %v608 = vand.u32 2147483647, %v598
          %vm609 = vcmp.eq.f32.partialorder %v608, 8.507059e+37
          %v610 = vand.u32 %v598, 2147483648
          %v611 = vor.u32 1.1754944e-38, %v610
          %v612 = vsel %vm609, %v611, %v607
          %v613 = vmul.f32 1.0, %v612
          %v614 = vtanh.pop %v594
          %616 = vrot.lane.b32.xlu0 %v557, 32
          %v617 = vpop.permute.xlu0 %616
          %v619 = vmul.f32 %v613, %v617
          %621 = vrot.lane.b32.xlu0 %v614, 64
          %v622 = vpop.permute.xlu0 %621
          %v624 = vmul.f32 %v613, %v622
          %626 = vrot.lane.b32.xlu0 %v624, 32
          %v627 = vpop.permute.xlu0 %626
          %v629 = vadd.f32 %v619, %v627
          %v630 = vtanh.pop %v629
          %632 = vrot.lane.b32.xlu0 %v630, 64
          %v633 = vpop.permute.xlu0 %632
          %v635 = vmul.f32 %v613, %v633
          %s636 = smul.u32 %s560, 2
          %s637 = scalar_lea.vmem [#allocation7], %s636
          %v638 = vld [vmem:[%s637] sm:$0x3]
          %v639 = vpack.c.bf16 %v558, %v558
          %v644 = vunpack.c.l.b16 %v542
          %v645 = vunpack.c.l.b16 %v543
          %v646 = vunpack.c.l.b16 %v544
          %v647 = vunpack.c.l.b16 %v545
          %v648 = vpack.c.b16 %v645, %v644
          %v649 = vpack.c.b16 %v647, %v646
          %v653 = vsel %vm577, %v639, 0
          %655 = vmatpush.bf16.msra.mxu0 0
          %656 = vmatpush.bf16.msra.mxu0 0
          %657 = vmatpush.bf16.msra.mxu0 0
          %658 = vmatpush.bf16.msra.mxu0 0
          %659 = vmatpush.bf16.msra.mxu0 0
          %660 = vmatpush.bf16.msra.mxu0 0
          %661 = vmatpush.bf16.msra.mxu0 %v649
          %662 = vmatpush.bf16.msra.mxu0 %v648
          %663 = vmatmul.bf16.gmra.mxu0 %v653
          %v664 = vpop.f32.mrf.mxu0
          %v665 = vadd.f32 0.0, %v664
          %v666 = vpop.f32.mrf.mxu0
          %667 = vdwg.mxu0
          %v668 = vadd.f32 %v638, %v665
          %v669 = vxor.u32 %v668, 2147483648
          %v670 = vmul.f32 %v669, 1.442695
          %v671 = vpow.pop %v670
          %v672 = vadd.f32 %v671, 1.0
          %v673 = vrcp.pop %v672
          %v674 = vmul.f32 %v672, %v673
          %v675 = vsub.f32 1.0, %v674
          %v676 = vmul.f32 %v673, %v675
          %v677 = vadd.f32 %v673, %v676
          %vm678 = vweird.f32 %v672
          %vm679 = vweird.f32 %v673
          %vm680 = vmor %vm678, %vm679
          %v681 = vsel %vm680, %v673, %v677
          %v682 = vand.u32 2147483647, %v672
          %vm683 = vcmp.eq.f32.partialorder %v682, 8.507059e+37
          %v684 = vand.u32 %v672, 2147483648
          %v685 = vor.u32 1.1754944e-38, %v684
          %v686 = vsel %vm683, %v685, %v681
          %v687 = vmul.f32 1.0, %v686
          %v688 = vtanh.pop %v668
          %690 = vrot.lane.b32.xlu0 %v559, 32
          %v691 = vpop.permute.xlu0 %690
          %v693 = vmul.f32 %v687, %v691
          %695 = vrot.lane.b32.xlu0 %v688, 64
          %v696 = vpop.permute.xlu0 %695
          %v698 = vmul.f32 %v687, %v696
          %700 = vrot.lane.b32.xlu0 %v698, 32
          %v701 = vpop.permute.xlu0 %700
          %v703 = vadd.f32 %v693, %v701
          %v704 = vtanh.pop %v703
          %706 = vrot.lane.b32.xlu0 %v704, 64
          %v707 = vpop.permute.xlu0 %706
          %v709 = vmul.f32 %v687, %v707
          %711 = vrot.lane.b32.xlu0 %v635, 32
          %v712 = vpop.permute.xlu0 %711
          %s714 = scalar_lea.vmem %s398, %s561 [#allocation16]
          %vm715 = vcmask 254976
          %716 = vst.msk [vmem:[%s714] sm:$0x3] %vm715, %v712
          %718 = vrot.lane.b32.xlu0 %v709, 32
          %v719 = vpop.permute.xlu0 %718
          %s721 = scalar_lea.vmem %s405, %s636 [#allocation17]
          %722 = vst.msk [vmem:[%s721] sm:$0x3] %vm715, %v719
          %724 = vrot.lane.b32.xlu0 %v629, 96
          %v725 = vpop.permute.xlu0 %724
          %728 = vrot.lane.b32.xlu0 %v703, 96
          %v729 = vpop.permute.xlu0 %728
        $region65: #{tpu_custom_call.1} parent=39 // loop_footer
          %s555 = sadd.s32 1, %s551
        $region66: #{tpu_custom_call.1} parent=39 // loop_footer_branch
          %550 = sbr.rel target = $region62
        $region67: #{tpu_custom_call.1} parent=39 // loop_exit
          _
        %vm731 = vcmask 254976
        %732 = vst.msk [vmem:[#allocation2] sm:$0x3] %vm731, %v556
        %733 = vst.msk [vmem:[#allocation3] sm:$0x3] %vm731, %v557
        %734 = vst.msk [vmem:[#allocation4] sm:$0x3] %vm731, %v558
        %735 = vst.msk [vmem:[#allocation5] sm:$0x3] %vm731, %v559
        %p736 = scmp.eq.s32.totalorder %s34, 1
        // Predicated region
        $region68: #{tpu_custom_call.1} parent=39 // pred_check
          %p737 = pneg %p736
        $region69: #{tpu_custom_call.1} parent=39 // pred_check_branch
          %739 = sbr.rel (%p737) target = $region71
        $region70: #{tpu_custom_call.1} parent=39 // pred_region
          %740 = vst.msk [vmem:[#allocation19] sm:$0x3] %vm731, %v556
          %s741 = scalar_lea.vmem [#allocation19], 2
          %742 = vst.msk [vmem:[%s741] sm:$0x3] %vm731, %v558
          %743 = vst.msk [vmem:[#allocation20] sm:$0x3] %vm731, %v557
          %s744 = scalar_lea.vmem [#allocation20], 2
          %745 = vst.msk [vmem:[%s744] sm:$0x3] %vm731, %v559
        $region71: #{tpu_custom_call.1} parent=39 // pred_fallthru
          _
        %s746 = sand.u32 %s159, 1
        %s747 = scalar_lea.sflag [#allocation10], %s746
        %s748 = sand.u32 %s159, 1
        %s749 = smul.addr %s748, 8
        %s750 = scalar_lea.vmem [#allocation16], %s749
        %s751 = sand.u32 %s34, 1
        %s752 = scalar_lea.sflag [#allocation18], %s751
        %s753 = sand.u32 %s187, 1
        %s754 = smul.addr %s753, 8
        %s755 = scalar_lea.vmem [#allocation17], %s754
        // Predicated region
        $region72: #{tpu_custom_call.1} parent=39 // pred_check
          %p756 = pneg %p169
        $region73: #{tpu_custom_call.1} parent=39 // pred_check_branch
          %758 = sbr.rel (%p756) target = $region75
        $region74: #{tpu_custom_call.1} parent=39 // pred_region
          %s759 = smul.u32 4, %s34
          %761 = vsyncadd %s747, 0
          %s762 = smul.addr %s759, 2
          %s763 = scalar_lea.hbm %s5, %s762
          %s764 = sshll.u32 %s750, 4
          %s765 = int_to_ptr.vmem [resolvable:$true] %s764
          %s766 = sshll.u32 %s763, 4
          %s767 = int_to_ptr.hbm [resolvable:$true] %s766
          %772 = dma.vmem_to_hbm [thread:$0]  %s765, 128, %s767, %s747, 32, 32, 2
        $region75: #{tpu_custom_call.1} parent=39 // pred_fallthru
          _
        // Predicated region
        $region76: #{tpu_custom_call.1} parent=39 // pred_check
          %p773 = pneg %p197
        $region77: #{tpu_custom_call.1} parent=39 // pred_check_branch
          %775 = sbr.rel (%p773) target = $region79
        $region78: #{tpu_custom_call.1} parent=39 // pred_region
          %s776 = ssub.s32 1, %s34
          %s777 = smul.u32 4, %s776
          %779 = vsyncadd %s752, 0
          %s780 = smul.addr %s777, 2
          %s781 = scalar_lea.hbm %s6, %s780
          %s782 = sshll.u32 %s755, 4
          %s783 = int_to_ptr.vmem [resolvable:$true] %s782
          %s784 = sshll.u32 %s781, 4
          %s785 = int_to_ptr.hbm [resolvable:$true] %s784
          %790 = dma.vmem_to_hbm [thread:$0]  %s783, 128, %s785, %s752, 32, 32, 2
        $region79: #{tpu_custom_call.1} parent=39 // pred_fallthru
          _
        // Predicated region
        $region80: #{tpu_custom_call.1} parent=39 // pred_check
          %p791 = pneg %p218
        $region81: #{tpu_custom_call.1} parent=39 // pred_check_branch
          %793 = sbr.rel (%p791) target = $region83
        $region82: #{tpu_custom_call.1} parent=39 // pred_region
          %795 = vsyncadd [#allocation18], 0
          %s796 = sshll.u32 [#allocation19], 4
          %s797 = int_to_ptr.vmem [resolvable:$true] %s796
          %s798 = sshll.u32 %s7, 4
          %s799 = int_to_ptr.hbm [resolvable:$true] %s798
          %804 = dma.vmem_to_hbm [thread:$0]  %s797, 64, %s799, [#allocation18], 32, 32, 2
        $region83: #{tpu_custom_call.1} parent=39 // pred_fallthru
          _
        // Predicated region
        $region84: #{tpu_custom_call.1} parent=39 // pred_check
          %p805 = pneg %p239
        $region85: #{tpu_custom_call.1} parent=39 // pred_check_branch
          %807 = sbr.rel (%p805) target = $region87
        $region86: #{tpu_custom_call.1} parent=39 // pred_region
          %809 = vsyncadd [#allocation21], 0
          %s810 = sshll.u32 [#allocation20], 4
          %s811 = int_to_ptr.vmem [resolvable:$true] %s810
          %s812 = sshll.u32 %s8, 4
          %s813 = int_to_ptr.hbm [resolvable:$true] %s812
          %818 = dma.vmem_to_hbm [thread:$0]  %s811, 64, %s813, [#allocation21], 32, 32, 2
        $region87: #{tpu_custom_call.1} parent=39 // pred_fallthru
          _
        // Predicated region
        $region88: #{tpu_custom_call.1} parent=39 // pred_check
          %p819 = pneg %p218
        $region89: #{tpu_custom_call.1} parent=39 // pred_check_branch
          %821 = sbr.rel (%p819) target = $region91
        $region90: #{tpu_custom_call.1} parent=39 // pred_region
          %823 = dma.done [#allocation18], 64
        $region91: #{tpu_custom_call.1} parent=39 // pred_fallthru
          _
        // Predicated region
        $region92: #{tpu_custom_call.1} parent=39 // pred_check
          %p824 = pneg %p239
        $region93: #{tpu_custom_call.1} parent=39 // pred_check_branch
          %826 = sbr.rel (%p824) target = $region95
        $region94: #{tpu_custom_call.1} parent=39 // pred_region
          %828 = dma.done [#allocation21], 64
        $region95: #{tpu_custom_call.1} parent=39 // pred_fallthru
          _
      $region40: #{tpu_custom_call.1} parent=5 // pred_fallthru
        _
      %p829 = scmp.le.s32.totalorder 2, %s29
      // Predicated region
      $region96: #{tpu_custom_call.1} parent=5 // pred_check
        %p830 = pneg %p829
      $region97: #{tpu_custom_call.1} parent=5 // pred_check_branch
        %832 = sbr.rel (%p830) target = $region99
      $region98: #{tpu_custom_call.1} parent=5 // pred_region
        %s833 = ssub.s32 %s29, 2
        // Predicated region
        $region100: #{tpu_custom_call.1} parent=98 // pred_check
          %p834 = pneg %p175
        $region101: #{tpu_custom_call.1} parent=98 // pred_check_branch
          %836 = sbr.rel (%p834) target = $region103
        $region102: #{tpu_custom_call.1} parent=98 // pred_region
          %s837 = sand.u32 %s160, 1
          %s838 = scalar_lea.sflag [#allocation10], %s837
          %s839 = sand.u32 %s160, 1
          %s840 = smul.addr %s839, 8
          %s841 = scalar_lea.vmem [#allocation16], %s840
          %843 = dma.done %s838, 128
        $region103: #{tpu_custom_call.1} parent=98 // pred_fallthru
          _
        // Predicated region
        $region104: #{tpu_custom_call.1} parent=98 // pred_check
          %p844 = pneg %p203
        $region105: #{tpu_custom_call.1} parent=98 // pred_check_branch
          %846 = sbr.rel (%p844) target = $region107
        $region106: #{tpu_custom_call.1} parent=98 // pred_region
          %s847 = sand.u32 %s35, 1
          %s848 = scalar_lea.sflag [#allocation18], %s847
          %s849 = sand.u32 %s188, 1
          %s850 = smul.addr %s849, 8
          %s851 = scalar_lea.vmem [#allocation17], %s850
          %853 = dma.done %s848, 128
        $region107: #{tpu_custom_call.1} parent=98 // pred_fallthru
          _
      $region99: #{tpu_custom_call.1} parent=5 // pred_fallthru
        _
    $region6: #{tpu_custom_call.1} parent=1 // loop_footer
      %s33 = sadd.s32 1, %s29
    $region7: #{tpu_custom_call.1} parent=1 // loop_footer_branch
      %28 = sbr.rel target = $region3
    $region8: #{tpu_custom_call.1} parent=1 // loop_exit
      _
    %854 = vsyncpa [#allocation9], 1
    %s855 = scalar_lea.sflag [#allocation9], 1
    %856 = vsyncpa %s855, 1
    %857 = vsyncpa [#allocation12], 1
    %s858 = scalar_lea.sflag [#allocation12], 1
    %859 = vsyncpa %s858, 1
    %860 = vsyncpa [#allocation15], 1
    %861 = vsyncpa [#allocation10], 1
    %s862 = scalar_lea.sflag [#allocation10], 1
    %863 = vsyncpa %s862, 1
    %864 = vsyncpa [#allocation18], 1
    %s865 = scalar_lea.sflag [#allocation18], 1
    %866 = vsyncpa %s865, 1
    %867 = vsyncpa [#allocation21], 1

</llo_original>
